<compile_context>
chip_gen: v6e
topology: v6e:2x2x1
jax: 0.10.0
libtpu: 0.0.40
codegen_flags: <defaults>
</compile_context>

<pallas_src>
import functools

import jax
import jax.numpy as jnp
from jax.experimental import pallas as pl
from jax.experimental.pallas import tpu as pltpu


_MIB = 1 << 20


@functools.lru_cache(maxsize=1)
def _vmem_capacity_bytes():
    """Physical per-core VMEM; conservative (v7x, 64 MiB) fallback on failure."""
    try:
        return int(pltpu.get_tpu_info().vmem_capacity_bytes)
    except Exception:
        return 64 * _MIB


def _fused_vmem_budget():
    # ~40 MiB on v7x (64 MiB physical per TC), ~80 MiB on v5e/v6e (128 MiB).
    return (_vmem_capacity_bytes() * 5) // 8


def _vmem_limit(needed_bytes):
    # Headroom for compiler-internal scratch; clamp at ~3/4 of physical VMEM
    # (~48 MiB on v7x, ~96 MiB on v5e/v6e).
    clamp = (_vmem_capacity_bytes() * 3) // 4
    return int(min(max(needed_bytes + 4 * _MIB, 16 * _MIB), clamp))


# Per-(C, hw_tile) byte targets for the tiled path.  Phase 2 double-buffers
# input AND output (~4x tile -> ~32 MiB worst case); phase 1 only double
# buffers its input (its output is the tiny resident (C,1) accumulator), so it
# gets a 2x larger tile for the same VMEM footprint.
_RESCALE_TILE_TARGET_BYTES = 8 * _MIB
_POOL_TILE_TARGET_BYTES = 16 * _MIB


def _cdiv(a, b):
    return -(-a // b)


def _pick_hw_tile(hw, c, itemsize, target_bytes):
    """Whole HW if it fits the target, else the largest 128-multiple that does.

    Tiles need not divide HW: ragged tails are handled with cdiv grids plus
    in-kernel masking (phase 1) / dropped out-of-bounds writes (phase 2).
    """
    row_bytes = max(1, c * itemsize)
    max_cols = target_bytes // row_bytes
    if hw <= max_cols:
        return hw
    # TODO(synk): for extreme C (c * 128 * itemsize >> target) the lane-minimum
    # 128-wide tile is still large; a C-tiled variant would be needed there.
    return max(128, (max_cols // 128) * 128)


def _channel_conv_sigmoid(y, w_ref, k_size):
    """k-tap zero-padded cross-correlation across channels + sigmoid.

    y: (C, 1) f32 per-channel means. Matches torch.nn.Conv1d(1,1,k,bias=False)
    with padding=(k-1)//2 applied along the channel axis.
    """
    c = y.shape[0]
    pad = (k_size - 1) // 2
    if pad > 0:
        zp = jnp.zeros((pad, 1), jnp.float32)
        yp = jnp.concatenate([zp, y, zp], axis=0)          # (C + 2*pad, 1)
    else:
        yp = y
    conv = jnp.zeros((c, 1), jnp.float32)
    for t in range(k_size):                                # static unrolled taps
        conv = conv + w_ref[t] * yp[t:t + c, :]
    return jax.nn.sigmoid(conv)                            # (C, 1) f32


# --------------------------------------------------------------------------
# Path 1: fused whole-slab kernel (1 read + 1 write of x per batch element).
# --------------------------------------------------------------------------
def _eca_fused_kernel(w_ref, x_ref, o_ref, *, k_size, hw):
    x = x_ref[...]                                         # (C, HW) native dtype
    # dtype= keeps the upcast fused into the reduction: no f32 slab copy.
    y = jnp.sum(x, axis=1, keepdims=True, dtype=jnp.float32) * (1.0 / hw)
    att = _channel_conv_sigmoid(y, w_ref, k_size)          # (C, 1) f32
    o_ref[...] = x * att.astype(x.dtype)                   # native-dtype rescale


# --------------------------------------------------------------------------
# Path 2 (tiled): kernel A = per-channel pooled sums (resident accumulator,
# tail-masked, optional 2-way split for megacore); tiny conv1d+sigmoid in JAX;
# kernel B = streamed broadcast rescale.
# --------------------------------------------------------------------------
def _eca_pool_kernel(x_ref, sum_ref, *, hw, hw_t, per_split, masked):
    s = pl.program_id(1)
    j = pl.program_id(2)

    @pl.when(j == 0)
    def _init():
        sum_ref[...] = jnp.zeros_like(sum_ref)

    x = x_ref[...]                                         # (C, hw_t) native
    if masked:
        t = s * per_split + j                              # intended HW-tile index
        col = jax.lax.broadcasted_iota(jnp.int32, x.shape, 1)
        x = jnp.where(t * hw_t + col < hw, x, jnp.zeros_like(x))
    sum_ref[...] += jnp.sum(x, axis=1, keepdims=True, dtype=jnp.float32)


def _eca_rescale_kernel(att_ref, x_ref, o_ref):
    x = x_ref[...]                                         # (C, hw_t) native
    o_ref[...] = x * att_ref[...].astype(x.dtype)          # (C, 1) broadcast


def eca_forward(x, weight, *, mode=None, hw_tile=None, pool_hw_tile=None):
    """x: (B, C, H, W) NCHW, weight: (k_size,) Conv1d weight (squeezed)."""
    b, c, h, w = x.shape
    hw = h * w
    k_size = int(weight.shape[0])
    itemsize = jnp.dtype(x.dtype).itemsize
    slab_bytes = c * hw * itemsize
    weight = weight.astype(jnp.float32)
    x2 = x.reshape(b, c, hw)

    if mode is None:
        # Fused whole-slab path whenever double-buffered in+out fits the
        # generation-aware budget (including B == 1: 2 slab passes vs 3).
        mode = "fused" if 4 * slab_bytes + 2 * _MIB <= _fused_vmem_budget() else "tiled"

    if mode == "fused":
        needed = 4 * slab_bytes + 2 * _MIB
        cost = pl.CostEstimate(
            flops=2 * b * c * hw + 2 * b * c * k_size,
            transcendentals=b * c,
            bytes_accessed=2 * b * slab_bytes + k_size * 4)
        out = pl.pallas_call(
            functools.partial(_eca_fused_kernel, k_size=k_size, hw=hw),
            out_shape=jax.ShapeDtypeStruct((b, c, hw), x.dtype),
            grid=(b,),
            in_specs=[
                pl.BlockSpec(memory_space=pltpu.MemorySpace.SMEM),   # conv weight
                pl.BlockSpec((None, c, hw), lambda i: (i, 0, 0)),    # batch slab
            ],
            out_specs=pl.BlockSpec((None, c, hw), lambda i: (i, 0, 0)),
            compiler_params=pltpu.CompilerParams(
                dimension_semantics=("parallel",),
                vmem_limit_bytes=_vmem_limit(needed)),
            cost_estimate=cost,
        )(weight, x2)
        return out.reshape(b, c, h, w)

    # ---------------- tiled two-phase path ----------------
    hw_t2 = int(hw_tile) if hw_tile is not None else _pick_hw_tile(
        hw, c, itemsize, _RESCALE_TILE_TARGET_BYTES)
    hw_t1 = int(pool_hw_tile) if pool_hw_tile is not None else _pick_hw_tile(
        hw, c, itemsize, _POOL_TILE_TARGET_BYTES)
    for t in (hw_t1, hw_t2):
        assert t == hw or t % 128 == 0, "HW tiles must be whole-HW or 128-multiples"

    # Phase 1: per-channel pooled sums, accumulator resident over the HW axis.
    n_hw1 = _cdiv(hw, hw_t1)
    # Split the reduction over a second *parallel* axis when the batch alone
    # cannot keep both v7x TensorCores busy (B == 1 / odd B).
    n_split = 2 if (b % 2 == 1 and n_hw1 >= 2) else 1
    per_split = _cdiv(n_hw1, n_split)
    masked = (hw % hw_t1 != 0) or (n_split * per_split != n_hw1)
    tile1_bytes = c * hw_t1 * itemsize

    def pool_in_map(i, s, j):
        # Clamp so the DMA window stays in bounds; the in-kernel mask zeroes
        # any duplicated / out-of-range columns before accumulation.
        return (i, 0, jnp.minimum(s * per_split + j, n_hw1 - 1))

    cost_a = pl.CostEstimate(
        flops=b * c * hw,
        transcendentals=0,
        bytes_accessed=b * slab_bytes + b * n_split * c * 4)
    sums = pl.pallas_call(
        functools.partial(_eca_pool_kernel, hw=hw, hw_t=hw_t1,
                          per_split=per_split, masked=masked),
        out_shape=jax.ShapeDtypeStruct((b * n_split, c, 1), jnp.float32),
        grid=(b, n_split, per_split),
        in_specs=[pl.BlockSpec((None, c, hw_t1), pool_in_map)],
        out_specs=pl.BlockSpec((None, c, 1),
                               lambda i, s, j: (i * n_split + s, 0, 0)),
        compiler_params=pltpu.CompilerParams(
            dimension_semantics=("parallel", "parallel", "arbitrary"),
            vmem_limit_bytes=_vmem_limit(2 * tile1_bytes + 8 * c * 4)),
        cost_estimate=cost_a,
    )(x2)

    # Tiny (B, C) finalize in plain JAX: mean -> conv1d across channels -> sigmoid.
    y = sums.reshape(b, n_split, c).sum(axis=1) * (1.0 / hw)       # (B, C) f32
    pad = (k_size - 1) // 2
    yp = jnp.pad(y, ((0, 0), (pad, pad)))
    conv = sum(weight[t] * yp[:, t:t + c] for t in range(k_size))
    att = jax.nn.sigmoid(conv).reshape(b, c, 1)                    # (B, C, 1) f32

    # Phase 2: broadcast rescale streamed in (C, hw_t2) tiles (ragged tails:
    # out-of-bounds columns of the last block are simply not written back).
    n_hw2 = _cdiv(hw, hw_t2)
    tile2_bytes = c * hw_t2 * itemsize
    cost_b = pl.CostEstimate(
        flops=b * c * hw,
        transcendentals=0,
        bytes_accessed=2 * b * slab_bytes + b * n_hw2 * c * 4)
    out = pl.pallas_call(
        _eca_rescale_kernel,
        out_shape=jax.ShapeDtypeStruct((b, c, hw), x.dtype),
        grid=(b, n_hw2),
        in_specs=[
            pl.BlockSpec((None, c, 1), lambda i, j: (i, 0, 0)),      # attention
            pl.BlockSpec((None, c, hw_t2), lambda i, j: (i, 0, j)),  # x tile
        ],
        out_specs=pl.BlockSpec((None, c, hw_t2), lambda i, j: (i, 0, j)),
        compiler_params=pltpu.CompilerParams(
            dimension_semantics=("parallel", "parallel"),
            vmem_limit_bytes=_vmem_limit(4 * tile2_bytes + 2 * c * 4)),
        cost_estimate=cost_b,
    )(att, x2)
    return out.reshape(b, c, h, w)


def eca_reference(x, weight):
    """Pure-JAX reference matching the PyTorch module."""
    k_size = weight.shape[0]
    pad = (k_size - 1) // 2
    y = jnp.mean(x.astype(jnp.float32), axis=(2, 3))               # (B, C)
    yp = jnp.pad(y, ((0, 0), (pad, pad)))
    conv = sum(weight[j] * yp[:, j:j + y.shape[1]] for j in range(k_size))
    att = jax.nn.sigmoid(conv)[:, :, None, None]
    return (x.astype(jnp.float32) * att).astype(x.dtype)


if __name__ == "__main__":
    key = jax.random.PRNGKey(0)
    kx, kw, kx2 = jax.random.split(key, 3)

    K_SIZE = 3
    # Deterministic Conv1d(1, 1, k, bias=False)-style weight init.
    bound = 1.0 / jnp.sqrt(jnp.float32(K_SIZE))
    weight = jax.random.uniform(kw, (K_SIZE,), dtype=jnp.float32,
                                minval=-bound, maxval=bound)

    # ---- Case 1: auto path (fused whole-slab), B=2 ----
    x = jax.random.normal(kx, (2, 4, 16, 16), dtype=jnp.float32)
    ref = eca_reference(x, weight)
    out = eca_forward(x, weight)
    jax.block_until_ready(out)
    assert out.shape == x.shape and out.dtype == x.dtype
    assert jnp.allclose(out, ref, atol=1e-5, rtol=1e-5)

    # ---- Case 2: forced tiled path, HW divisible by the tile (accumulator
    #      init/accumulate across the arbitrary axis + streamed rescale) ----
    out_t = eca_forward(x, weight, mode="tiled", hw_tile=128, pool_hw_tile=128)
    jax.block_until_ready(out_t)
    assert out_t.shape == x.shape and out_t.dtype == x.dtype
    assert jnp.allclose(out_t, ref, atol=1e-5, rtol=1e-5)

    # ---- Case 3: tiled path with ragged HW (H*W=320, tile=128) and B=1, which
    #      exercises tail masking, the clamped index map and the 2-way
    #      phase-1 core split ----
    x3 = jax.random.normal(kx2, (1, 8, 16, 20), dtype=jnp.float32)
    ref3 = eca_reference(x3, weight)
    out3 = eca_forward(x3, weight, mode="tiled", hw_tile=128, pool_hw_tile=128)
    jax.block_until_ready(out3)
    assert out3.shape == x3.shape and out3.dtype == x3.dtype
    assert jnp.allclose(out3, ref3, atol=1e-5, rtol=1e-5)

    # ---- Case 4: bf16 smoke test (native-dtype streaming, loose tol) ----
    x_bf16 = x.astype(jnp.bfloat16)
    out_bf16 = eca_forward(x_bf16, weight, mode="tiled",
                           hw_tile=128, pool_hw_tile=128)
    jax.block_until_ready(out_bf16)
    ref_bf16 = eca_reference(x_bf16, weight)
    assert out_bf16.dtype == jnp.bfloat16
    assert jnp.allclose(out_bf16.astype(jnp.float32),
                        ref_bf16.astype(jnp.float32), atol=1e-1, rtol=1e-1)

    print("KERNEL_OK")
</pallas_src>

<mosaic_0001>
module attributes {stable_mosaic.version = 11 : i64} {
  func.func @_eca_fused_kernel(%arg0: i32, %arg1: memref<3xf32, #tpu.memory_space<smem>>, %arg2: memref<1x4x256xf32, #tpu.memory_space<vmem>>, %arg3: memref<1x4x256xf32, #tpu.memory_space<vmem>>) attributes {dimension_semantics = [#tpu.dimension_semantics<parallel>], iteration_bounds = array<i64: 2>, scalar_prefetch = 0 : i64, scratch_operands = 0 : i64, tpu.core_type = #tpu.core_type<tc>, window_params = [{transform_indices = @transform_0, window_bounds = array<i64: 3>}, {transform_indices = @transform_1, window_bounds = array<i64: 1, 4, 256>}, {transform_indices = @transform_2, window_bounds = array<i64: 1, 4, 256>}]} {
    %c0 = arith.constant 0 : index
    %c0_0 = arith.constant 0 : index
    %c0_1 = arith.constant 0 : index
    %0 = vector.load %arg2[%c0, %c0_0, %c0_1] : memref<1x4x256xf32, #tpu.memory_space<vmem>>, vector<1x4x256xf32>
    %1 = vector.shape_cast %0 : vector<1x4x256xf32> to vector<4x256xf32>
    %cst = arith.constant dense<0.000000e+00> : vector<4xf32>
    %2 = vector.multi_reduction <add>, %1, %cst [1] : vector<4x256xf32> to vector<4xf32>
    %3 = vector.shape_cast %2 : vector<4xf32> to vector<4x1xf32>
    %cst_2 = arith.constant 3.906250e-03 : f32
    %4 = vector.broadcast %cst_2 : f32 to vector<4x1xf32>
    %5 = arith.mulf %3, %4 : vector<4x1xf32>
    %cst_3 = arith.constant 0.000000e+00 : f32
    %6 = vector.broadcast %cst_3 : f32 to vector<1x1xf32>
    %7 = tpu.concatenate %6, %5, %6 in 0 : vector<1x1xf32>, vector<4x1xf32>, vector<1x1xf32> -> vector<6x1xf32>
    %cst_4 = arith.constant 0.000000e+00 : f32
    %8 = vector.broadcast %cst_4 : f32 to vector<4x1xf32>
    %c0_5 = arith.constant 0 : index
    %9 = memref.load %arg1[%c0_5] : memref<3xf32, #tpu.memory_space<smem>>
    %10 = vector.extract_strided_slice %7 {offsets = [0, 0], sizes = [4, 1], strides = [1, 1]} : vector<6x1xf32> to vector<4x1xf32>
    %11 = vector.broadcast %9 : f32 to vector<4x1xf32>
    %12 = arith.mulf %11, %10 : vector<4x1xf32>
    %13 = arith.addf %8, %12 : vector<4x1xf32>
    %c1 = arith.constant 1 : index
    %14 = memref.load %arg1[%c1] : memref<3xf32, #tpu.memory_space<smem>>
    %15 = vector.extract_strided_slice %7 {offsets = [1, 0], sizes = [4, 1], strides = [1, 1]} : vector<6x1xf32> to vector<4x1xf32>
    %16 = vector.broadcast %14 : f32 to vector<4x1xf32>
    %17 = arith.mulf %16, %15 : vector<4x1xf32>
    %18 = arith.addf %13, %17 : vector<4x1xf32>
    %c2 = arith.constant 2 : index
    %19 = memref.load %arg1[%c2] : memref<3xf32, #tpu.memory_space<smem>>
    %20 = vector.extract_strided_slice %7 {offsets = [2, 0], sizes = [4, 1], strides = [1, 1]} : vector<6x1xf32> to vector<4x1xf32>
    %21 = vector.broadcast %19 : f32 to vector<4x1xf32>
    %22 = arith.mulf %21, %20 : vector<4x1xf32>
    %23 = arith.addf %18, %22 : vector<4x1xf32>
    %24 = arith.negf %23 : vector<4x1xf32>
    %25 = math.exp %24 : vector<4x1xf32>
    %cst_6 = arith.constant 1.000000e+00 : f32
    %26 = vector.broadcast %cst_6 : f32 to vector<4x1xf32>
    %27 = arith.addf %26, %25 : vector<4x1xf32>
    %28 = arith.divf %26, %27 : vector<4x1xf32>
    %29 = vector.broadcast %28 : vector<4x1xf32> to vector<4x256xf32>
    %30 = arith.mulf %1, %29 : vector<4x256xf32>
    %c0_7 = arith.constant 0 : index
    %c0_8 = arith.constant 0 : index
    %c0_9 = arith.constant 0 : index
    %31 = vector.load %arg3[%c0_7, %c0_8, %c0_9] : memref<1x4x256xf32, #tpu.memory_space<vmem>>, vector<1x4x256xf32>
    %32 = vector.shape_cast %31 : vector<1x4x256xf32> to vector<4x256xf32>
    %33 = vector.shape_cast %30 : vector<4x256xf32> to vector<1x4x256xf32>
    tpu.vector_store %arg3[%c0_7, %c0_8, %c0_9], %33 {strides = array<i32>} : memref<1x4x256xf32, #tpu.memory_space<vmem>>, vector<1x4x256xf32>,
    return
  }
  func.func @transform_0(%arg0: i32) -> i32 {
    %c0_i32 = arith.constant 0 : i32
    %c0_i32_0 = arith.constant 0 : i32
    return %c0_i32 : i32
  }
  func.func @transform_1(%arg0: i32) -> (i32, i32, i32) {
    %c0_i32 = arith.constant 0 : i32
    %c0_i32_0 = arith.constant 0 : i32
    %c0_i32_1 = arith.constant 0 : i32
    return %arg0, %c0_i32, %c0_i32_0 : i32, i32, i32
  }
  func.func @transform_2(%arg0: i32) -> (i32, i32, i32) {
    %c0_i32 = arith.constant 0 : i32
    %c0_i32_0 = arith.constant 0 : i32
    %c0_i32_1 = arith.constant 0 : i32
    return %arg0, %c0_i32, %c0_i32_0 : i32, i32, i32
  }
}

</mosaic_0001>

<llo_original>
// kernel: tpu_custom_call.1
$region0: #{tpu_custom_call.1}
  #allocation0 [shape = 'u32[]', space=smem, size = 0x4, offset = 0x4, fixed_abs, tag = 'smem constant byte address 0x4 - core index']
  #allocation1 [shape = 'u32[144,128]{1,0:T(1,128)}', space=vmem, size = 0x12000, scoped, tag = 'internal scratch']
  %s0 = inlined_call_operand.hbm [shape: f32[3], index: 0, kind: input, shape index: {}]
  %s1 = inlined_call_operand.hbm [shape: f32[2,4,256], index: 1, kind: input, shape index: {}]
  %s2 = inlined_call_operand.hbm [shape: f32[2,4,256], index: 2, kind: output, shape index: {}]
  %s3 = sld [smem:[#allocation0]]
  $region49: #{tpu_custom_call.1} parent=0
    _
  %s5 = ssub.s32 1, %s3
  %s6 = scalar_select 0, %s5, %s3
  $region1: #{tpu_custom_call.1} parent=0
    #allocation2 [shape = 'u8[512]{0}', space=smem, size = 0x200, scoped, tag = 'input window, operand 0, single buffered']
    #allocation3 [shape = 's32[2]{0}', space=sflag, size = 0x8, scoped, tag = 'scoped memory for tpu_custom_call.1']
    #allocation4 [shape = 's32[2]{0}', space=sflag, size = 0x8, scoped, tag = 'scoped memory for tpu_custom_call.1']
    #allocation5 [shape = 's32[2]{0}', space=sflag, size = 0x8, scoped, tag = 'scoped memory for tpu_custom_call.1']
    #allocation6 [shape = 'u8[8192]{0}', space=vmem, size = 0x2000, scoped, tag = 'input window, operand 1']
    #allocation7 [shape = 'u8[8192]{0}', space=vmem, size = 0x2000, scoped, tag = 'output window, operand 0']
    %7 = vsyncpa [#allocation5], 0
    %8 = vsyncpa [#allocation3], 0
    %s9 = scalar_lea.sflag [#allocation3], 1
    %10 = vsyncpa %s9, 0
    %11 = vsyncpa [#allocation4], 0
    %s12 = scalar_lea.sflag [#allocation4], 1
    %13 = vsyncpa %s12, 0
    loop: start=0, step=1, limit=4
    $region2: #{tpu_custom_call.1} parent=1 // loop_pre_header
      _
    $region3: #{tpu_custom_call.1} parent=1 // loop_header
      %s15 = sphi 0, %s19
      %p16 = scmp.ge.s32.totalorder %s15, 4
      %s23 = sphi 0, %s23
      %s25 = sphi 0, %s23
      %s26 = sphi 0, %s25
      %s40 = sphi 0, %s26
      %s46 = sphi 0, %s48
      %s49 = sphi 0, %s46
      %s50 = sphi 0, %s49
      %s66 = sphi 0, %s50
      %s72 = sphi 0, %s74
      %s75 = sphi 0, %s72
      %s76 = sphi 0, %s75
      %s92 = sphi 0, %s76
    $region4: #{tpu_custom_call.1} parent=1 // loop_header_branch
      %18 = sbr.rel (%p16) target = $region8
    $region5: #{tpu_custom_call.1} parent=1 // loop_body
      %s20 = ssub.s32 %s15, 1
      %s21 = ssub.s32 %s15, 2
      %s22 = sadd.s32 %s15, 1
      %s24 = sadd.s32 %s23, 1
      %p27 = scmp.eq.s32.totalorder %s15, 1
      %p28 = scmp.ne.s32.totalorder %s23, %s25
      %p29 = scmp.eq.s32.totalorder %s15, 0
      %p30 = por %p28, %p29
      %p31 = scmp.ne.s32.totalorder %s23, %s25
      %p32 = scmp.eq.s32.totalorder %s20, 1
      %p33 = por %p31, %p32
      %p34 = scmp.ne.s32.totalorder %s25, %s26
      %p35 = scmp.eq.s32.totalorder %s20, 0
      %p36 = por %p34, %p35
      %p37 = scmp.ne.s32.totalorder %s25, %s26
      %p38 = scmp.eq.s32.totalorder %s21, 1
      %p39 = por %p37, %p38
      %p41 = scmp.ne.s32.totalorder %s26, %s40
      %p42 = scmp.eq.s32.totalorder %s21, 0
      %p43 = por %p41, %p42
      %s44 = ssub.s32 %s15, %s22
      %p45 = scmp.eq.s32.totalorder %s44, 0
      %s47 = sadd.s32 %s46, 1
      %s48 = scalar_select %p45, %s46, %s47
      %p51 = pneg %p45
      %p52 = scmp.eq.s32.totalorder %s15, 1
      %p53 = por %p51, %p52
      %p54 = scmp.ne.s32.totalorder %s46, %s49
      %p55 = scmp.eq.s32.totalorder %s15, 0
      %p56 = por %p54, %p55
      %p57 = scmp.ne.s32.totalorder %s46, %s49
      %p58 = scmp.eq.s32.totalorder %s20, 1
      %p59 = por %p57, %p58
      %p60 = scmp.ne.s32.totalorder %s49, %s50
      %p61 = scmp.eq.s32.totalorder %s20, 0
      %p62 = por %p60, %p61
      %p63 = scmp.ne.s32.totalorder %s49, %s50
      %p64 = scmp.eq.s32.totalorder %s21, 1
      %p65 = por %p63, %p64
      %p67 = scmp.ne.s32.totalorder %s50, %s66
      %p68 = scmp.eq.s32.totalorder %s21, 0
      %p69 = por %p67, %p68
      %s70 = ssub.s32 %s15, %s22
      %p71 = scmp.eq.s32.totalorder %s70, 0
      %s73 = sadd.s32 %s72, 1
      %s74 = scalar_select %p71, %s72, %s73
      %p77 = pneg %p71
      %p78 = scmp.eq.s32.totalorder %s15, 1
      %p79 = por %p77, %p78
      %p80 = scmp.ne.s32.totalorder %s72, %s75
      %p81 = scmp.eq.s32.totalorder %s15, 0
      %p82 = por %p80, %p81
      %p83 = scmp.ne.s32.totalorder %s72, %s75
      %p84 = scmp.eq.s32.totalorder %s20, 1
      %p85 = por %p83, %p84
      %p86 = scmp.ne.s32.totalorder %s75, %s76
      %p87 = scmp.eq.s32.totalorder %s20, 0
      %p88 = por %p86, %p87
      %p89 = scmp.ne.s32.totalorder %s75, %s76
      %p90 = scmp.eq.s32.totalorder %s21, 1
      %p91 = por %p89, %p90
      %p93 = scmp.ne.s32.totalorder %s76, %s92
      %p94 = scmp.eq.s32.totalorder %s21, 0
      %p95 = por %p93, %p94
      %p96 = scmp.le.s32.totalorder 1, %s15
      %p97 = scmp.lt.s32.totalorder %s15, 3
      %p98 = pnand %p96, %p97
      %p99 = pneg %p98
      // Predicated region
      $region9: #{tpu_custom_call.1} parent=5 // pred_check
        _
      $region10: #{tpu_custom_call.1} parent=5 // pred_check_branch
        %101 = sbr.rel (%p98) target = $region12
      $region11: #{tpu_custom_call.1} parent=5 // pred_region
        %s102 = ssub.s32 %s15, 1
        // Predicated region
        $region13: #{tpu_custom_call.1} parent=11 // pred_check
          %p103 = pneg %p36
        $region14: #{tpu_custom_call.1} parent=11 // pred_check_branch
          %105 = sbr.rel (%p103) target = $region16
        $region15: #{tpu_custom_call.1} parent=11 // pred_region
          %s107 = ssub.s32 16, 16
          %108 = vsyncadd [#allocation5], %s107
          %111 = dma.hbm_to_smem %s0, 16, [#allocation2], [#allocation5]
        $region16: #{tpu_custom_call.1} parent=11 // pred_fallthru
          _
      $region12: #{tpu_custom_call.1} parent=5 // pred_fallthru
        _
      %p112 = scmp.lt.s32.totalorder %s15, 2
      // Predicated region
      $region17: #{tpu_custom_call.1} parent=5 // pred_check
        %p113 = pneg %p112
      $region18: #{tpu_custom_call.1} parent=5 // pred_check_branch
        %115 = sbr.rel (%p113) target = $region20
      $region19: #{tpu_custom_call.1} parent=5 // pred_region
        // Predicated region
        $region21: #{tpu_custom_call.1} parent=19 // pred_check
          %p116 = pneg %p56
        $region22: #{tpu_custom_call.1} parent=19 // pred_check_branch
          %118 = sbr.rel (%p116) target = $region24
        $region23: #{tpu_custom_call.1} parent=19 // pred_region
          %s119 = sand.u32 %s46, 1
          %s120 = scalar_lea.sflag [#allocation3], %s119
          %s121 = sand.u32 %s46, 1
          %s122 = smul.addr %s121, 8
          %s123 = scalar_lea.vmem [#allocation6], %s122
          %s125 = ssub.s32 128, 128
          %126 = vsyncadd %s120, %s125
          %s127 = smul.addr %s15, 2
          %s128 = smul.addr %s127, 64
          %s129 = scalar_lea.hbm %s1, %s128
          %s131 = sshll.u32 %s123, 4
          %s132 = int_to_ptr.vmem [resolvable:$true] %s131
          %134 = dma.hbm_to_vmem [thread:$0]  %s129, 128, %s132, %s120
        $region24: #{tpu_custom_call.1} parent=19 // pred_fallthru
          _
      $region20: #{tpu_custom_call.1} parent=5 // pred_fallthru
        _
      %p135 = scmp.le.s32.totalorder 1, %s15
      %p136 = scmp.lt.s32.totalorder %s15, 3
      %p137 = pnand %p135, %p136
      %p138 = pneg %p137
      // Predicated region
      $region25: #{tpu_custom_call.1} parent=5 // pred_check
        _
      $region26: #{tpu_custom_call.1} parent=5 // pred_check_branch
        %140 = sbr.rel (%p137) target = $region28
      $region27: #{tpu_custom_call.1} parent=5 // pred_region
        %s141 = ssub.s32 %s15, 1
        // Predicated region
        $region29: #{tpu_custom_call.1} parent=27 // pred_check
          %p142 = pneg %p36
        $region30: #{tpu_custom_call.1} parent=27 // pred_check_branch
          %144 = sbr.rel (%p142) target = $region32
        $region31: #{tpu_custom_call.1} parent=27 // pred_region
          %145 = dma.done [#allocation5], 16
        $region32: #{tpu_custom_call.1} parent=27 // pred_fallthru
          _
        %s146 = sand.u32 %s49, 1
        %s147 = scalar_lea.sflag [#allocation3], %s146
        %s148 = sand.u32 %s49, 1
        %s149 = smul.addr %s148, 8
        %s150 = scalar_lea.vmem [#allocation6], %s149
        // Predicated region
        $region33: #{tpu_custom_call.1} parent=27 // pred_check
          %p151 = pneg %p62
        $region34: #{tpu_custom_call.1} parent=27 // pred_check_branch
          %153 = sbr.rel (%p151) target = $region36
        $region35: #{tpu_custom_call.1} parent=27 // pred_region
          %154 = dma.done %s147, 128
        $region36: #{tpu_custom_call.1} parent=27 // pred_fallthru
          _
        %155 = sfence
        %p156 = pneg %p36
        %p157 = pneg %p33
        %s158 = sand.u32 %s49, 1
        %s159 = scalar_lea.sflag [#allocation3], %s158
        %s160 = sand.u32 %s49, 1
        %s161 = smul.addr %s160, 8
        %s162 = scalar_lea.vmem [#allocation6], %s161
        %p163 = pneg %p62
        %p164 = pneg %p59
        %p165 = pneg %p88
        %p166 = pneg %p85
        %s167 = sand.u32 %s75, 1
        %s168 = scalar_lea.sflag [#allocation4], %s167
        %s169 = sand.u32 %s75, 1
        %s170 = smul.addr %s169, 8
        %s171 = scalar_lea.vmem [#allocation7], %s170
        %v172 = vld [vmem:[%s150] sm:$0xff]
        %v174 = vcombine.high %v172, %v172
        %vm176 = vcmask 1043456
        %v177 = vsel %vm176, %v172, 0.0
        %v178 = vsel %vm176, %v174, 0.0
        %v179 = vadd.f32 %v177, %v178
        %180 = vadd.xlane.f32.xlu0 %v179
        %v181 = vpop.xlane.xlu0 %180
        %v182 = vmul.f32 %v181, 0.00390625
        %v184 = vrot.slane %v182, 7
        %vm186 = vcmask 1040384
        %v187 = vsel %vm186, 0.0, %v184
        %vm188 = vcmask 1044480
        %v189 = vsel %vm188, %v187, 0.0
        %s190 = sld [smem:[#allocation2]]
        %v191 = vstv %s190
        %v192 = vmul.f32 %v191, %v189
        %v193 = vadd.f32 %v192, 0.0
        %s194 = sld [smem:[#allocation2 + $0x1]]
        %v195 = vstv %s194
        %v196 = vmul.f32 %v195, %v189
        %v198 = vrot.slane %v196, 1
        %v200 = vadd.f32 %v193, %v198
        %s201 = sld [smem:[#allocation2 + $0x2]]
        %v202 = vstv %s201
        %v203 = vmul.f32 %v202, %v189
        %v205 = vrot.slane %v203, 2
        %v207 = vadd.f32 %v200, %v205
        %v208 = vxor.u32 %v207, 2147483648
        %v209 = vmul.f32 %v208, 1.442695
        %v210 = vpow.pop %v209
        %v211 = vadd.f32 %v210, 1.0
        %v212 = vrcp.pop %v211
        %v213 = vmul.f32 1.0, %v212
        %215 = vset.pattern.permute.xlu0 0
        %216 = vperm.xlu0 %215, %v213
        %v217 = vpop.permute.xlu0 %216
        %v219 = vunpack.c.l.s4 839922192
        %v220 = vunpack.c.0.s8 %v219
        %v221 = vlaneseq
        %v222 = vshrl.u32 %v221, 7
        %v223 = vsub.s32 %v220, %v222
        %v224 = vrot.slane %v217, %v223
        %v226 = vmul.f32 %v172, %v224
        %227 = vst [vmem:[%s171] sm:$0xff] %v226
        %s228 = sand.u32 %s75, 1
        %s229 = scalar_lea.sflag [#allocation4], %s228
        %s230 = sand.u32 %s75, 1
        %s231 = smul.addr %s230, 8
        %s232 = scalar_lea.vmem [#allocation7], %s231
        // Predicated region
        $region37: #{tpu_custom_call.1} parent=27 // pred_check
          %p233 = pneg %p85
        $region38: #{tpu_custom_call.1} parent=27 // pred_check_branch
          %235 = sbr.rel (%p233) target = $region40
        $region39: #{tpu_custom_call.1} parent=27 // pred_region
          %s237 = ssub.s32 128, 128
          %238 = vsyncadd %s229, %s237
          %s239 = smul.addr %s20, 2
          %s240 = smul.addr %s239, 64
          %s241 = scalar_lea.hbm %s2, %s240
          %s243 = sshll.u32 %s232, 4
          %s244 = int_to_ptr.vmem [resolvable:$true] %s243
          %246 = dma.vmem_to_hbm [thread:$0]  %s244, 128, %s241, %s229
        $region40: #{tpu_custom_call.1} parent=27 // pred_fallthru
          _
      $region28: #{tpu_custom_call.1} parent=5 // pred_fallthru
        _
      %p247 = scmp.le.s32.totalorder 2, %s15
      // Predicated region
      $region41: #{tpu_custom_call.1} parent=5 // pred_check
        %p248 = pneg %p247
      $region42: #{tpu_custom_call.1} parent=5 // pred_check_branch
        %250 = sbr.rel (%p248) target = $region44
      $region43: #{tpu_custom_call.1} parent=5 // pred_region
        %s251 = ssub.s32 %s15, 2
        // Predicated region
        $region45: #{tpu_custom_call.1} parent=43 // pred_check
          %p252 = pneg %p91
        $region46: #{tpu_custom_call.1} parent=43 // pred_check_branch
          %254 = sbr.rel (%p252) target = $region48
        $region47: #{tpu_custom_call.1} parent=43 // pred_region
          %s255 = sand.u32 %s76, 1
          %s256 = scalar_lea.sflag [#allocation4], %s255
          %s257 = sand.u32 %s76, 1
          %s258 = smul.addr %s257, 8
          %s259 = scalar_lea.vmem [#allocation7], %s258
          %260 = dma.done %s256, 128
        $region48: #{tpu_custom_call.1} parent=43 // pred_fallthru
          _
      $region44: #{tpu_custom_call.1} parent=5 // pred_fallthru
        _
    $region6: #{tpu_custom_call.1} parent=1 // loop_footer
      %s19 = sadd.s32 1, %s15
    $region7: #{tpu_custom_call.1} parent=1 // loop_footer_branch
      %14 = sbr.rel target = $region3
    $region8: #{tpu_custom_call.1} parent=1 // loop_exit
      _
    %261 = vsyncpa [#allocation3], 1
    %s262 = scalar_lea.sflag [#allocation3], 1
    %263 = vsyncpa %s262, 1
    %264 = vsyncpa [#allocation4], 1
    %s265 = scalar_lea.sflag [#allocation4], 1
    %266 = vsyncpa %s265, 1
    %267 = vsyncpa [#allocation5], 1
    %s268 = scalar_lea.sflag [#allocation5], 1
    %269 = vsyncpa %s268, 1

</llo_original>
